<compile_context>
chip_gen: v5e
topology: v5e:2x2
jax: 0.10.0
libtpu: 0.0.40
codegen_flags: <defaults>
</compile_context>

<pallas_src>
import jax
import jax.numpy as jnp
from jax import lax
from jax.experimental import pallas as pl
from jax.experimental.pallas import tpu as pltpu

# Small synthetic sizes consistent with TrajectoryGeneratorSO's constructor.
OBS_LEN = 8      # obs_len
N_PED   = 8      # total pedestrians (LSTM batch)
EMB     = 32     # embedding_dim
ENC_H   = 32     # encoder_h_dim
MLP_DIM = 128    # mlp_dim
DEC_H   = 64     # decoder_h_dim (== mlp_decoder_context output dim; noise_first_dim = 0)
OUT_PAD = 128    # lane-dense padded output width (sliced back to DEC_H in wrapper)
EPS     = 1e-5   # BatchNorm1d eps


def traj_gen_so_kernel(obs_ref, vecs_ref, whh_ref, w1_ref, w2_ref, out_ref):
    N = out_ref.shape[0]             # pedestrians
    H = whh_ref.shape[0]             # encoder hidden dim
    G = whh_ref.shape[1]             # 4*H
    T = obs_ref.shape[0] // N        # obs_len (static Python int)

    # ---- packed 128-wide vectors (one DMA) ---------------------------------
    vecs   = vecs_ref[...]           # (9, 128)
    w_comb = vecs[0:2, :]            # folded spatial-embedding -> gate proj, (2, 4H)
    b_comb = vecs[2:3, :]            # folded b_emb@W_ih + b_ih + b_hh, (1, 4H)
    b1     = vecs[3:4, :]
    g1     = vecs[4:5, :]
    be1    = vecs[5:6, :]
    b2     = vecs[6:7, :]
    g2     = vecs[7:8, :]
    be2    = vecs[8:9, :]

    # ---- hoisted input-side work: gate pre-activations for all timesteps ---
    # spatial_embedding + x@W_ih + biases collapse to two broadcast FMAs (VPU).
    obs = obs_ref[...]               # (T*N, 2) relative displacements
    pre = (obs[:, 0:1] * w_comb[0:1, :]
           + obs[:, 1:2] * w_comb[1:2, :]
           + b_comb)                 # (T*N, 4H), gate columns [i|f|o|g]

    whh = whh_ref[...]               # (H, 4H), gate columns [i|f|o|g]

    # ---- serial LSTM recurrence; h/c and the gate tiles stay in vregs ------
    h = jnp.zeros((N, H), jnp.float32)   # Encoder.init_hidden -> zeros
    c = jnp.zeros((N, H), jnp.float32)
    for t in range(T):                   # fully unrolled, static indices
        gates = pre[t * N:(t + 1) * N, :] + jnp.dot(
            h, whh, preferred_element_type=jnp.float32)      # (N, 4H)
        sg = jax.nn.sigmoid(gates)       # one full-vreg EUP pass
        tg = jnp.tanh(gates)             # one full-vreg EUP pass
        i_g = sg[:, 0 * H:1 * H]
        f_g = sg[:, 1 * H:2 * H]
        o_g = sg[:, 2 * H:3 * H]
        g_g = tg[:, 3 * H:4 * H]
        c = f_g * c + i_g * g_g
        h = o_g * jnp.tanh(c)

    # ---- mlp_decoder_context: Linear -> BatchNorm1d (training stats) -> ReLU (x2)
    def bn_relu(z, gamma, beta):
        mean = jnp.mean(z, axis=0, keepdims=True)
        var = jnp.mean((z - mean) ** 2, axis=0, keepdims=True)   # biased variance
        zn = (z - mean) * lax.rsqrt(var + EPS)
        return jnp.maximum(zn * gamma + beta, 0.0)

    z1 = jnp.dot(h, w1_ref[...], preferred_element_type=jnp.float32) + b1
    a1 = bn_relu(z1, g1, be1)
    z2 = jnp.dot(a1, w2_ref[...], preferred_element_type=jnp.float32) + b2
    out_ref[...] = bn_relu(z2, g2, be2)      # lane-dense (N, 128) store


def make_params(key):
    ks = jax.random.split(key, 12)
    s = 0.2

    def nrm(k, shape, scale=s):
        return scale * jax.random.normal(k, shape, dtype=jnp.float32)

    return {
        # spatial_embedding: Linear(2, EMB)  (stored transposed)
        "w_emb": nrm(ks[0], (2, EMB)),
        "b_emb": nrm(ks[1], (1, EMB)),
        # encoder LSTM(EMB, ENC_H), PyTorch gate order [i, f, g, o]
        "w_ih": nrm(ks[2], (EMB, 4 * ENC_H)),
        "b_ih": nrm(ks[3], (1, 4 * ENC_H)),
        "w_hh": nrm(ks[4], (ENC_H, 4 * ENC_H)),
        "b_hh": nrm(ks[5], (1, 4 * ENC_H)),
        # mlp_decoder_context layer 1: Linear(ENC_H, MLP_DIM) + BN(MLP_DIM)
        "w1": nrm(ks[6], (ENC_H, MLP_DIM)),
        "b1": nrm(ks[7], (1, MLP_DIM)),
        "g1": 1.0 + nrm(ks[8], (1, MLP_DIM), 0.1),
        "be1": nrm(ks[9], (1, MLP_DIM), 0.1),
        # mlp_decoder_context layer 2: Linear(MLP_DIM, DEC_H) + BN(DEC_H)
        "w2": nrm(ks[10], (MLP_DIM, DEC_H)),
        "b2": nrm(ks[11], (1, DEC_H)),
        "g2": jnp.ones((1, DEC_H), jnp.float32),
        "be2": jnp.zeros((1, DEC_H), jnp.float32),
    }


def _reorder_gates(w):
    """Reorder gate blocks from PyTorch [i|f|g|o] to kernel order [i|f|o|g]."""
    i, f, g, o = jnp.split(w, 4, axis=-1)
    return jnp.concatenate([i, f, o, g], axis=-1)


def prepare_params(params):
    """One-time parameter plumbing (runs once, outside the per-call jit).

    Folds the spatial embedding into the LSTM input projection, folds the two
    LSTM biases, reorders gate columns, pads the DEC_H-wide output layer to a
    lane-dense 128 columns, and packs all 128-wide vectors into one array.
    """
    wih = _reorder_gates(params["w_ih"])                      # (EMB, 4H)
    whh = _reorder_gates(params["w_hh"])                      # (H, 4H)
    bias = _reorder_gates(params["b_ih"] + params["b_hh"])    # (1, 4H)

    # Algebraic fold: spatial_embedding(x) @ W_ih == x @ (w_emb @ W_ih) + b_emb @ W_ih
    w_comb = params["w_emb"] @ wih                            # (2, 4H)
    b_comb = params["b_emb"] @ wih + bias                     # (1, 4H)

    pad = OUT_PAD - DEC_H
    w2 = jnp.pad(params["w2"], ((0, 0), (0, pad)))
    b2 = jnp.pad(params["b2"], ((0, 0), (0, pad)))
    g2 = jnp.pad(params["g2"], ((0, 0), (0, pad)), constant_values=1.0)
    be2 = jnp.pad(params["be2"], ((0, 0), (0, pad)))

    vecs = jnp.concatenate(
        [w_comb, b_comb,
         params["b1"], params["g1"], params["be1"],
         b2, g2, be2], axis=0)                                # (9, 128)

    return {
        "vecs": jax.device_put(vecs),
        "whh": jax.device_put(whh),
        "w1": jax.device_put(params["w1"]),
        "w2": jax.device_put(w2),
    }


@jax.jit
def traj_gen_so_forward(obs_traj, obs_traj_rel, seq_start_end, prepared):
    # obs_traj / seq_start_end are only consumed by the (disabled) pooling branch.
    del obs_traj, seq_start_end
    T, N, _ = obs_traj_rel.shape
    obs_flat = obs_traj_rel.reshape(T * N, 2)

    out_padded = pl.pallas_call(
        traj_gen_so_kernel,
        out_shape=jax.ShapeDtypeStruct((N, OUT_PAD), jnp.float32),
        in_specs=[pl.BlockSpec(memory_space=pltpu.MemorySpace.VMEM)] * 5,
        out_specs=pl.BlockSpec(memory_space=pltpu.MemorySpace.VMEM),
    )(obs_flat, prepared["vecs"], prepared["whh"], prepared["w1"], prepared["w2"])

    noise_input = out_padded[:, :DEC_H]
    # get_noise_shape returns the input tensor when noise_dim is None.
    return noise_input, noise_input


def reference_forward(obs_traj_rel, params):
    """Plain-JAX replica of the PyTorch forward (for verification)."""
    T, N, _ = obs_traj_rel.shape
    e = obs_traj_rel.reshape(-1, 2) @ params["w_emb"] + params["b_emb"]
    e = e.reshape(T, N, EMB)
    h = jnp.zeros((N, ENC_H), jnp.float32)
    c = jnp.zeros((N, ENC_H), jnp.float32)
    for t in range(T):
        gates = e[t] @ params["w_ih"] + params["b_ih"] + h @ params["w_hh"] + params["b_hh"]
        i = jax.nn.sigmoid(gates[:, :ENC_H])
        f = jax.nn.sigmoid(gates[:, ENC_H:2 * ENC_H])
        g = jnp.tanh(gates[:, 2 * ENC_H:3 * ENC_H])
        o = jax.nn.sigmoid(gates[:, 3 * ENC_H:])
        c = f * c + i * g
        h = o * jnp.tanh(c)

    def bn_relu(z, gamma, beta):
        m = z.mean(0, keepdims=True)
        v = ((z - m) ** 2).mean(0, keepdims=True)
        return jnp.maximum((z - m) / jnp.sqrt(v + EPS) * gamma + beta, 0.0)

    a1 = bn_relu(h @ params["w1"] + params["b1"], params["g1"], params["be1"])
    return bn_relu(a1 @ params["w2"] + params["b2"], params["g2"], params["be2"])


if __name__ == "__main__":
    key = jax.random.PRNGKey(0)
    k_in, k_par = jax.random.split(key)
    k1, k2 = jax.random.split(k_in)

    obs_traj = jax.random.normal(k1, (OBS_LEN, N_PED, 2), dtype=jnp.float32)            # absolute positions
    obs_traj_rel = 0.5 * jax.random.normal(k2, (OBS_LEN, N_PED, 2), dtype=jnp.float32)  # relative displacements
    seq_start_end = jnp.array([[0, N_PED]], dtype=jnp.int32)                            # single sequence

    params = make_params(k_par)
    prepared = prepare_params(params)   # one-time plumbing, outside the jitted path

    noise_input, noise_shape = traj_gen_so_forward(obs_traj, obs_traj_rel, seq_start_end, prepared)
    noise_input = jax.block_until_ready(noise_input)

    ref = reference_forward(obs_traj_rel, params)
    assert noise_input.shape == (N_PED, DEC_H)
    assert jnp.allclose(noise_input, ref, atol=2e-3, rtol=2e-3), (
        float(jnp.max(jnp.abs(noise_input - ref))))

    print("KERNEL_OK")
</pallas_src>

<mosaic_0001>
module attributes {stable_mosaic.version = 11 : i64} {
  func.func @traj_gen_so_kernel(%arg0: memref<64x2xf32, #tpu.memory_space<vmem>>, %arg1: memref<9x128xf32, #tpu.memory_space<vmem>>, %arg2: memref<32x128xf32, #tpu.memory_space<vmem>>, %arg3: memref<32x128xf32, #tpu.memory_space<vmem>>, %arg4: memref<128x128xf32, #tpu.memory_space<vmem>>, %arg5: memref<8x128xf32, #tpu.memory_space<vmem>>) attributes {dimension_semantics = [], scalar_prefetch = 0 : i64, scratch_operands = 0 : i64, tpu.core_type = #tpu.core_type<tc>} {
    %c0 = arith.constant 0 : index
    %c0_0 = arith.constant 0 : index
    %0 = vector.load %arg1[%c0, %c0_0] : memref<9x128xf32, #tpu.memory_space<vmem>>, vector<9x128xf32>
    %1 = vector.extract_strided_slice %0 {offsets = [0, 0], sizes = [2, 128], strides = [1, 1]} : vector<9x128xf32> to vector<2x128xf32>
    %2 = vector.extract_strided_slice %0 {offsets = [2, 0], sizes = [1, 128], strides = [1, 1]} : vector<9x128xf32> to vector<1x128xf32>
    %3 = vector.extract_strided_slice %0 {offsets = [3, 0], sizes = [1, 128], strides = [1, 1]} : vector<9x128xf32> to vector<1x128xf32>
    %4 = vector.extract_strided_slice %0 {offsets = [4, 0], sizes = [1, 128], strides = [1, 1]} : vector<9x128xf32> to vector<1x128xf32>
    %5 = vector.extract_strided_slice %0 {offsets = [5, 0], sizes = [1, 128], strides = [1, 1]} : vector<9x128xf32> to vector<1x128xf32>
    %6 = vector.extract_strided_slice %0 {offsets = [6, 0], sizes = [1, 128], strides = [1, 1]} : vector<9x128xf32> to vector<1x128xf32>
    %7 = vector.extract_strided_slice %0 {offsets = [7, 0], sizes = [1, 128], strides = [1, 1]} : vector<9x128xf32> to vector<1x128xf32>
    %8 = vector.extract_strided_slice %0 {offsets = [8, 0], sizes = [1, 128], strides = [1, 1]} : vector<9x128xf32> to vector<1x128xf32>
    %c0_1 = arith.constant 0 : index
    %c0_2 = arith.constant 0 : index
    %9 = vector.load %arg0[%c0_1, %c0_2] : memref<64x2xf32, #tpu.memory_space<vmem>>, vector<64x2xf32>
    %10 = vector.extract_strided_slice %9 {offsets = [0, 0], sizes = [64, 1], strides = [1, 1]} : vector<64x2xf32> to vector<64x1xf32>
    %11 = vector.extract_strided_slice %1 {offsets = [0, 0], sizes = [1, 128], strides = [1, 1]} : vector<2x128xf32> to vector<1x128xf32>
    %12 = vector.broadcast %10 : vector<64x1xf32> to vector<64x128xf32>
    %13 = vector.broadcast %11 : vector<1x128xf32> to vector<64x128xf32>
    %14 = arith.mulf %12, %13 : vector<64x128xf32>
    %15 = vector.extract_strided_slice %9 {offsets = [0, 1], sizes = [64, 1], strides = [1, 1]} : vector<64x2xf32> to vector<64x1xf32>
    %16 = vector.extract_strided_slice %1 {offsets = [1, 0], sizes = [1, 128], strides = [1, 1]} : vector<2x128xf32> to vector<1x128xf32>
    %17 = vector.broadcast %15 : vector<64x1xf32> to vector<64x128xf32>
    %18 = vector.broadcast %16 : vector<1x128xf32> to vector<64x128xf32>
    %19 = arith.mulf %17, %18 : vector<64x128xf32>
    %20 = arith.addf %14, %19 : vector<64x128xf32>
    %21 = vector.broadcast %2 : vector<1x128xf32> to vector<64x128xf32>
    %22 = arith.addf %20, %21 : vector<64x128xf32>
    %c0_3 = arith.constant 0 : index
    %c0_4 = arith.constant 0 : index
    %23 = vector.load %arg2[%c0_3, %c0_4] : memref<32x128xf32, #tpu.memory_space<vmem>>, vector<32x128xf32>
    %cst = arith.constant 0.000000e+00 : f32
    %24 = vector.broadcast %cst : f32 to vector<8x32xf32>
    %cst_5 = arith.constant 0.000000e+00 : f32
    %25 = vector.broadcast %cst_5 : f32 to vector<8x32xf32>
    %26 = vector.extract_strided_slice %22 {offsets = [0, 0], sizes = [8, 128], strides = [1, 1]} : vector<64x128xf32> to vector<8x128xf32>
    %cst_6 = arith.constant dense<0.000000e+00> : vector<8x128xf32>
    %27 = tpu.matmul %24, %23, %cst_6 {dimension_numbers = #tpu.dot_dimension_numbers<[1], [0], [0], [1], [0, 0, 1, 1], [], []>} : vector<8x32xf32>, vector<32x128xf32>, vector<8x128xf32> -> vector<8x128xf32>
    %28 = arith.addf %26, %27 : vector<8x128xf32>
    %29 = arith.negf %28 : vector<8x128xf32>
    %30 = math.exp %29 : vector<8x128xf32>
    %cst_7 = arith.constant 1.000000e+00 : f32
    %31 = vector.broadcast %cst_7 : f32 to vector<8x128xf32>
    %32 = arith.addf %31, %30 : vector<8x128xf32>
    %33 = arith.divf %31, %32 : vector<8x128xf32>
    %34 = math.tanh %28 : vector<8x128xf32>
    %35 = vector.extract_strided_slice %33 {offsets = [0, 0], sizes = [8, 32], strides = [1, 1]} : vector<8x128xf32> to vector<8x32xf32>
    %36 = vector.extract_strided_slice %33 {offsets = [0, 32], sizes = [8, 32], strides = [1, 1]} : vector<8x128xf32> to vector<8x32xf32>
    %37 = vector.extract_strided_slice %33 {offsets = [0, 64], sizes = [8, 32], strides = [1, 1]} : vector<8x128xf32> to vector<8x32xf32>
    %38 = vector.extract_strided_slice %34 {offsets = [0, 96], sizes = [8, 32], strides = [1, 1]} : vector<8x128xf32> to vector<8x32xf32>
    %39 = arith.mulf %36, %25 : vector<8x32xf32>
    %40 = arith.mulf %35, %38 : vector<8x32xf32>
    %41 = arith.addf %39, %40 : vector<8x32xf32>
    %42 = math.tanh %41 : vector<8x32xf32>
    %43 = arith.mulf %37, %42 : vector<8x32xf32>
    %44 = vector.extract_strided_slice %22 {offsets = [8, 0], sizes = [8, 128], strides = [1, 1]} : vector<64x128xf32> to vector<8x128xf32>
    %cst_8 = arith.constant dense<0.000000e+00> : vector<8x128xf32>
    %45 = tpu.matmul %43, %23, %cst_8 {dimension_numbers = #tpu.dot_dimension_numbers<[1], [0], [0], [1], [0, 0, 1, 1], [], []>} : vector<8x32xf32>, vector<32x128xf32>, vector<8x128xf32> -> vector<8x128xf32>
    %46 = arith.addf %44, %45 : vector<8x128xf32>
    %47 = arith.negf %46 : vector<8x128xf32>
    %48 = math.exp %47 : vector<8x128xf32>
    %cst_9 = arith.constant 1.000000e+00 : f32
    %49 = vector.broadcast %cst_9 : f32 to vector<8x128xf32>
    %50 = arith.addf %49, %48 : vector<8x128xf32>
    %51 = arith.divf %49, %50 : vector<8x128xf32>
    %52 = math.tanh %46 : vector<8x128xf32>
    %53 = vector.extract_strided_slice %51 {offsets = [0, 0], sizes = [8, 32], strides = [1, 1]} : vector<8x128xf32> to vector<8x32xf32>
    %54 = vector.extract_strided_slice %51 {offsets = [0, 32], sizes = [8, 32], strides = [1, 1]} : vector<8x128xf32> to vector<8x32xf32>
    %55 = vector.extract_strided_slice %51 {offsets = [0, 64], sizes = [8, 32], strides = [1, 1]} : vector<8x128xf32> to vector<8x32xf32>
    %56 = vector.extract_strided_slice %52 {offsets = [0, 96], sizes = [8, 32], strides = [1, 1]} : vector<8x128xf32> to vector<8x32xf32>
    %57 = arith.mulf %54, %41 : vector<8x32xf32>
    %58 = arith.mulf %53, %56 : vector<8x32xf32>
    %59 = arith.addf %57, %58 : vector<8x32xf32>
    %60 = math.tanh %59 : vector<8x32xf32>
    %61 = arith.mulf %55, %60 : vector<8x32xf32>
    %62 = vector.extract_strided_slice %22 {offsets = [16, 0], sizes = [8, 128], strides = [1, 1]} : vector<64x128xf32> to vector<8x128xf32>
    %cst_10 = arith.constant dense<0.000000e+00> : vector<8x128xf32>
    %63 = tpu.matmul %61, %23, %cst_10 {dimension_numbers = #tpu.dot_dimension_numbers<[1], [0], [0], [1], [0, 0, 1, 1], [], []>} : vector<8x32xf32>, vector<32x128xf32>, vector<8x128xf32> -> vector<8x128xf32>
    %64 = arith.addf %62, %63 : vector<8x128xf32>
    %65 = arith.negf %64 : vector<8x128xf32>
    %66 = math.exp %65 : vector<8x128xf32>
    %cst_11 = arith.constant 1.000000e+00 : f32
    %67 = vector.broadcast %cst_11 : f32 to vector<8x128xf32>
    %68 = arith.addf %67, %66 : vector<8x128xf32>
    %69 = arith.divf %67, %68 : vector<8x128xf32>
    %70 = math.tanh %64 : vector<8x128xf32>
    %71 = vector.extract_strided_slice %69 {offsets = [0, 0], sizes = [8, 32], strides = [1, 1]} : vector<8x128xf32> to vector<8x32xf32>
    %72 = vector.extract_strided_slice %69 {offsets = [0, 32], sizes = [8, 32], strides = [1, 1]} : vector<8x128xf32> to vector<8x32xf32>
    %73 = vector.extract_strided_slice %69 {offsets = [0, 64], sizes = [8, 32], strides = [1, 1]} : vector<8x128xf32> to vector<8x32xf32>
    %74 = vector.extract_strided_slice %70 {offsets = [0, 96], sizes = [8, 32], strides = [1, 1]} : vector<8x128xf32> to vector<8x32xf32>
    %75 = arith.mulf %72, %59 : vector<8x32xf32>
    %76 = arith.mulf %71, %74 : vector<8x32xf32>
    %77 = arith.addf %75, %76 : vector<8x32xf32>
    %78 = math.tanh %77 : vector<8x32xf32>
    %79 = arith.mulf %73, %78 : vector<8x32xf32>
    %80 = vector.extract_strided_slice %22 {offsets = [24, 0], sizes = [8, 128], strides = [1, 1]} : vector<64x128xf32> to vector<8x128xf32>
    %cst_12 = arith.constant dense<0.000000e+00> : vector<8x128xf32>
    %81 = tpu.matmul %79, %23, %cst_12 {dimension_numbers = #tpu.dot_dimension_numbers<[1], [0], [0], [1], [0, 0, 1, 1], [], []>} : vector<8x32xf32>, vector<32x128xf32>, vector<8x128xf32> -> vector<8x128xf32>
    %82 = arith.addf %80, %81 : vector<8x128xf32>
    %83 = arith.negf %82 : vector<8x128xf32>
    %84 = math.exp %83 : vector<8x128xf32>
    %cst_13 = arith.constant 1.000000e+00 : f32
    %85 = vector.broadcast %cst_13 : f32 to vector<8x128xf32>
    %86 = arith.addf %85, %84 : vector<8x128xf32>
    %87 = arith.divf %85, %86 : vector<8x128xf32>
    %88 = math.tanh %82 : vector<8x128xf32>
    %89 = vector.extract_strided_slice %87 {offsets = [0, 0], sizes = [8, 32], strides = [1, 1]} : vector<8x128xf32> to vector<8x32xf32>
    %90 = vector.extract_strided_slice %87 {offsets = [0, 32], sizes = [8, 32], strides = [1, 1]} : vector<8x128xf32> to vector<8x32xf32>
    %91 = vector.extract_strided_slice %87 {offsets = [0, 64], sizes = [8, 32], strides = [1, 1]} : vector<8x128xf32> to vector<8x32xf32>
    %92 = vector.extract_strided_slice %88 {offsets = [0, 96], sizes = [8, 32], strides = [1, 1]} : vector<8x128xf32> to vector<8x32xf32>
    %93 = arith.mulf %90, %77 : vector<8x32xf32>
    %94 = arith.mulf %89, %92 : vector<8x32xf32>
    %95 = arith.addf %93, %94 : vector<8x32xf32>
    %96 = math.tanh %95 : vector<8x32xf32>
    %97 = arith.mulf %91, %96 : vector<8x32xf32>
    %98 = vector.extract_strided_slice %22 {offsets = [32, 0], sizes = [8, 128], strides = [1, 1]} : vector<64x128xf32> to vector<8x128xf32>
    %cst_14 = arith.constant dense<0.000000e+00> : vector<8x128xf32>
    %99 = tpu.matmul %97, %23, %cst_14 {dimension_numbers = #tpu.dot_dimension_numbers<[1], [0], [0], [1], [0, 0, 1, 1], [], []>} : vector<8x32xf32>, vector<32x128xf32>, vector<8x128xf32> -> vector<8x128xf32>
    %100 = arith.addf %98, %99 : vector<8x128xf32>
    %101 = arith.negf %100 : vector<8x128xf32>
    %102 = math.exp %101 : vector<8x128xf32>
    %cst_15 = arith.constant 1.000000e+00 : f32
    %103 = vector.broadcast %cst_15 : f32 to vector<8x128xf32>
    %104 = arith.addf %103, %102 : vector<8x128xf32>
    %105 = arith.divf %103, %104 : vector<8x128xf32>
    %106 = math.tanh %100 : vector<8x128xf32>
    %107 = vector.extract_strided_slice %105 {offsets = [0, 0], sizes = [8, 32], strides = [1, 1]} : vector<8x128xf32> to vector<8x32xf32>
    %108 = vector.extract_strided_slice %105 {offsets = [0, 32], sizes = [8, 32], strides = [1, 1]} : vector<8x128xf32> to vector<8x32xf32>
    %109 = vector.extract_strided_slice %105 {offsets = [0, 64], sizes = [8, 32], strides = [1, 1]} : vector<8x128xf32> to vector<8x32xf32>
    %110 = vector.extract_strided_slice %106 {offsets = [0, 96], sizes = [8, 32], strides = [1, 1]} : vector<8x128xf32> to vector<8x32xf32>
    %111 = arith.mulf %108, %95 : vector<8x32xf32>
    %112 = arith.mulf %107, %110 : vector<8x32xf32>
    %113 = arith.addf %111, %112 : vector<8x32xf32>
    %114 = math.tanh %113 : vector<8x32xf32>
    %115 = arith.mulf %109, %114 : vector<8x32xf32>
    %116 = vector.extract_strided_slice %22 {offsets = [40, 0], sizes = [8, 128], strides = [1, 1]} : vector<64x128xf32> to vector<8x128xf32>
    %cst_16 = arith.constant dense<0.000000e+00> : vector<8x128xf32>
    %117 = tpu.matmul %115, %23, %cst_16 {dimension_numbers = #tpu.dot_dimension_numbers<[1], [0], [0], [1], [0, 0, 1, 1], [], []>} : vector<8x32xf32>, vector<32x128xf32>, vector<8x128xf32> -> vector<8x128xf32>
    %118 = arith.addf %116, %117 : vector<8x128xf32>
    %119 = arith.negf %118 : vector<8x128xf32>
    %120 = math.exp %119 : vector<8x128xf32>
    %cst_17 = arith.constant 1.000000e+00 : f32
    %121 = vector.broadcast %cst_17 : f32 to vector<8x128xf32>
    %122 = arith.addf %121, %120 : vector<8x128xf32>
    %123 = arith.divf %121, %122 : vector<8x128xf32>
    %124 = math.tanh %118 : vector<8x128xf32>
    %125 = vector.extract_strided_slice %123 {offsets = [0, 0], sizes = [8, 32], strides = [1, 1]} : vector<8x128xf32> to vector<8x32xf32>
    %126 = vector.extract_strided_slice %123 {offsets = [0, 32], sizes = [8, 32], strides = [1, 1]} : vector<8x128xf32> to vector<8x32xf32>
    %127 = vector.extract_strided_slice %123 {offsets = [0, 64], sizes = [8, 32], strides = [1, 1]} : vector<8x128xf32> to vector<8x32xf32>
    %128 = vector.extract_strided_slice %124 {offsets = [0, 96], sizes = [8, 32], strides = [1, 1]} : vector<8x128xf32> to vector<8x32xf32>
    %129 = arith.mulf %126, %113 : vector<8x32xf32>
    %130 = arith.mulf %125, %128 : vector<8x32xf32>
    %131 = arith.addf %129, %130 : vector<8x32xf32>
    %132 = math.tanh %131 : vector<8x32xf32>
    %133 = arith.mulf %127, %132 : vector<8x32xf32>
    %134 = vector.extract_strided_slice %22 {offsets = [48, 0], sizes = [8, 128], strides = [1, 1]} : vector<64x128xf32> to vector<8x128xf32>
    %cst_18 = arith.constant dense<0.000000e+00> : vector<8x128xf32>
    %135 = tpu.matmul %133, %23, %cst_18 {dimension_numbers = #tpu.dot_dimension_numbers<[1], [0], [0], [1], [0, 0, 1, 1], [], []>} : vector<8x32xf32>, vector<32x128xf32>, vector<8x128xf32> -> vector<8x128xf32>
    %136 = arith.addf %134, %135 : vector<8x128xf32>
    %137 = arith.negf %136 : vector<8x128xf32>
    %138 = math.exp %137 : vector<8x128xf32>
    %cst_19 = arith.constant 1.000000e+00 : f32
    %139 = vector.broadcast %cst_19 : f32 to vector<8x128xf32>
    %140 = arith.addf %139, %138 : vector<8x128xf32>
    %141 = arith.divf %139, %140 : vector<8x128xf32>
    %142 = math.tanh %136 : vector<8x128xf32>
    %143 = vector.extract_strided_slice %141 {offsets = [0, 0], sizes = [8, 32], strides = [1, 1]} : vector<8x128xf32> to vector<8x32xf32>
    %144 = vector.extract_strided_slice %141 {offsets = [0, 32], sizes = [8, 32], strides = [1, 1]} : vector<8x128xf32> to vector<8x32xf32>
    %145 = vector.extract_strided_slice %141 {offsets = [0, 64], sizes = [8, 32], strides = [1, 1]} : vector<8x128xf32> to vector<8x32xf32>
    %146 = vector.extract_strided_slice %142 {offsets = [0, 96], sizes = [8, 32], strides = [1, 1]} : vector<8x128xf32> to vector<8x32xf32>
    %147 = arith.mulf %144, %131 : vector<8x32xf32>
    %148 = arith.mulf %143, %146 : vector<8x32xf32>
    %149 = arith.addf %147, %148 : vector<8x32xf32>
    %150 = math.tanh %149 : vector<8x32xf32>
    %151 = arith.mulf %145, %150 : vector<8x32xf32>
    %152 = vector.extract_strided_slice %22 {offsets = [56, 0], sizes = [8, 128], strides = [1, 1]} : vector<64x128xf32> to vector<8x128xf32>
    %cst_20 = arith.constant dense<0.000000e+00> : vector<8x128xf32>
    %153 = tpu.matmul %151, %23, %cst_20 {dimension_numbers = #tpu.dot_dimension_numbers<[1], [0], [0], [1], [0, 0, 1, 1], [], []>} : vector<8x32xf32>, vector<32x128xf32>, vector<8x128xf32> -> vector<8x128xf32>
    %154 = arith.addf %152, %153 : vector<8x128xf32>
    %155 = arith.negf %154 : vector<8x128xf32>
    %156 = math.exp %155 : vector<8x128xf32>
    %cst_21 = arith.constant 1.000000e+00 : f32
    %157 = vector.broadcast %cst_21 : f32 to vector<8x128xf32>
    %158 = arith.addf %157, %156 : vector<8x128xf32>
    %159 = arith.divf %157, %158 : vector<8x128xf32>
    %160 = math.tanh %154 : vector<8x128xf32>
    %161 = vector.extract_strided_slice %159 {offsets = [0, 0], sizes = [8, 32], strides = [1, 1]} : vector<8x128xf32> to vector<8x32xf32>
    %162 = vector.extract_strided_slice %159 {offsets = [0, 32], sizes = [8, 32], strides = [1, 1]} : vector<8x128xf32> to vector<8x32xf32>
    %163 = vector.extract_strided_slice %159 {offsets = [0, 64], sizes = [8, 32], strides = [1, 1]} : vector<8x128xf32> to vector<8x32xf32>
    %164 = vector.extract_strided_slice %160 {offsets = [0, 96], sizes = [8, 32], strides = [1, 1]} : vector<8x128xf32> to vector<8x32xf32>
    %165 = arith.mulf %162, %149 : vector<8x32xf32>
    %166 = arith.mulf %161, %164 : vector<8x32xf32>
    %167 = arith.addf %165, %166 : vector<8x32xf32>
    %168 = math.tanh %167 : vector<8x32xf32>
    %169 = arith.mulf %163, %168 : vector<8x32xf32>
    %c0_22 = arith.constant 0 : index
    %c0_23 = arith.constant 0 : index
    %170 = vector.load %arg3[%c0_22, %c0_23] : memref<32x128xf32, #tpu.memory_space<vmem>>, vector<32x128xf32>
    %cst_24 = arith.constant dense<0.000000e+00> : vector<8x128xf32>
    %171 = tpu.matmul %169, %170, %cst_24 {dimension_numbers = #tpu.dot_dimension_numbers<[1], [0], [0], [1], [0, 0, 1, 1], [], []>} : vector<8x32xf32>, vector<32x128xf32>, vector<8x128xf32> -> vector<8x128xf32>
    %172 = vector.broadcast %3 : vector<1x128xf32> to vector<8x128xf32>
    %173 = arith.addf %171, %172 : vector<8x128xf32>
    %cst_25 = arith.constant dense<0.000000e+00> : vector<128xf32>
    %174 = vector.multi_reduction <add>, %173, %cst_25 [0] : vector<8x128xf32> to vector<128xf32>
    %175 = vector.shape_cast %174 : vector<128xf32> to vector<1x128xf32>
    %cst_26 = arith.constant 8.000000e+00 : f32
    %176 = vector.broadcast %cst_26 : f32 to vector<1x128xf32>
    %177 = arith.divf %175, %176 : vector<1x128xf32>
    %178 = vector.broadcast %177 : vector<1x128xf32> to vector<8x128xf32>
    %179 = arith.subf %173, %178 : vector<8x128xf32>
    %180 = arith.mulf %179, %179 : vector<8x128xf32>
    %cst_27 = arith.constant dense<0.000000e+00> : vector<128xf32>
    %181 = vector.multi_reduction <add>, %180, %cst_27 [0] : vector<8x128xf32> to vector<128xf32>
    %182 = vector.shape_cast %181 : vector<128xf32> to vector<1x128xf32>
    %cst_28 = arith.constant 8.000000e+00 : f32
    %183 = vector.broadcast %cst_28 : f32 to vector<1x128xf32>
    %184 = arith.divf %182, %183 : vector<1x128xf32>
    %185 = vector.broadcast %177 : vector<1x128xf32> to vector<8x128xf32>
    %186 = arith.subf %173, %185 : vector<8x128xf32>
    %cst_29 = arith.constant 9.99999974E-6 : f32
    %187 = vector.broadcast %cst_29 : f32 to vector<1x128xf32>
    %188 = arith.addf %184, %187 : vector<1x128xf32>
    %189 = math.rsqrt %188 : vector<1x128xf32>
    %190 = vector.broadcast %189 : vector<1x128xf32> to vector<8x128xf32>
    %191 = arith.mulf %186, %190 : vector<8x128xf32>
    %192 = vector.broadcast %4 : vector<1x128xf32> to vector<8x128xf32>
    %193 = arith.mulf %191, %192 : vector<8x128xf32>
    %194 = vector.broadcast %5 : vector<1x128xf32> to vector<8x128xf32>
    %195 = arith.addf %193, %194 : vector<8x128xf32>
    %cst_30 = arith.constant 0.000000e+00 : f32
    %196 = vector.broadcast %cst_30 : f32 to vector<8x128xf32>
    %197 = arith.maximumf %195, %196 : vector<8x128xf32>
    %c0_31 = arith.constant 0 : index
    %c0_32 = arith.constant 0 : index
    %198 = vector.load %arg4[%c0_31, %c0_32] : memref<128x128xf32, #tpu.memory_space<vmem>>, vector<128x128xf32>
    %cst_33 = arith.constant dense<0.000000e+00> : vector<8x128xf32>
    %199 = tpu.matmul %197, %198, %cst_33 {dimension_numbers = #tpu.dot_dimension_numbers<[1], [0], [0], [1], [0, 0, 1, 1], [], []>} : vector<8x128xf32>, vector<128x128xf32>, vector<8x128xf32> -> vector<8x128xf32>
    %200 = vector.broadcast %6 : vector<1x128xf32> to vector<8x128xf32>
    %201 = arith.addf %199, %200 : vector<8x128xf32>
    %cst_34 = arith.constant dense<0.000000e+00> : vector<128xf32>
    %202 = vector.multi_reduction <add>, %201, %cst_34 [0] : vector<8x128xf32> to vector<128xf32>
    %203 = vector.shape_cast %202 : vector<128xf32> to vector<1x128xf32>
    %cst_35 = arith.constant 8.000000e+00 : f32
    %204 = vector.broadcast %cst_35 : f32 to vector<1x128xf32>
    %205 = arith.divf %203, %204 : vector<1x128xf32>
    %206 = vector.broadcast %205 : vector<1x128xf32> to vector<8x128xf32>
    %207 = arith.subf %201, %206 : vector<8x128xf32>
    %208 = arith.mulf %207, %207 : vector<8x128xf32>
    %cst_36 = arith.constant dense<0.000000e+00> : vector<128xf32>
    %209 = vector.multi_reduction <add>, %208, %cst_36 [0] : vector<8x128xf32> to vector<128xf32>
    %210 = vector.shape_cast %209 : vector<128xf32> to vector<1x128xf32>
    %cst_37 = arith.constant 8.000000e+00 : f32
    %211 = vector.broadcast %cst_37 : f32 to vector<1x128xf32>
    %212 = arith.divf %210, %211 : vector<1x128xf32>
    %213 = vector.broadcast %205 : vector<1x128xf32> to vector<8x128xf32>
    %214 = arith.subf %201, %213 : vector<8x128xf32>
    %cst_38 = arith.constant 9.99999974E-6 : f32
    %215 = vector.broadcast %cst_38 : f32 to vector<1x128xf32>
    %216 = arith.addf %212, %215 : vector<1x128xf32>
    %217 = math.rsqrt %216 : vector<1x128xf32>
    %218 = vector.broadcast %217 : vector<1x128xf32> to vector<8x128xf32>
    %219 = arith.mulf %214, %218 : vector<8x128xf32>
    %220 = vector.broadcast %7 : vector<1x128xf32> to vector<8x128xf32>
    %221 = arith.mulf %219, %220 : vector<8x128xf32>
    %222 = vector.broadcast %8 : vector<1x128xf32> to vector<8x128xf32>
    %223 = arith.addf %221, %222 : vector<8x128xf32>
    %cst_39 = arith.constant 0.000000e+00 : f32
    %224 = vector.broadcast %cst_39 : f32 to vector<8x128xf32>
    %225 = arith.maximumf %223, %224 : vector<8x128xf32>
    %c0_40 = arith.constant 0 : index
    %c0_41 = arith.constant 0 : index
    %226 = vector.load %arg5[%c0_40, %c0_41] : memref<8x128xf32, #tpu.memory_space<vmem>>, vector<8x128xf32>
    tpu.vector_store %arg5[%c0_40, %c0_41], %225 {strides = array<i32>} : memref<8x128xf32, #tpu.memory_space<vmem>>, vector<8x128xf32>,
    return
  }
}

</mosaic_0001>

<llo_original>
// kernel: traj_gen_so_forward.1
$region0: #{traj_gen_so_forward.1}
  #allocation0 [shape = 'u32[]', space=smem, size = 0x4, offset = 0x4, fixed_abs, tag = 'smem constant byte address 0x4 - core index']
  #allocation1 [shape = 'u32[72,128]{1,0:T(1,128)}', space=vmem, size = 0x9000, scoped, tag = 'internal scratch']
  %s0 = inlined_call_operand.vmem [shape: f32[64,2], index: 0, kind: input, shape index: {}]
  %s1 = inlined_call_operand.vmem [shape: f32[9,128], index: 1, kind: input, shape index: {}]
  %s2 = inlined_call_operand.vmem [shape: f32[32,128], index: 2, kind: input, shape index: {}]
  %s3 = inlined_call_operand.vmem [shape: f32[32,128], index: 3, kind: input, shape index: {}]
  %s4 = inlined_call_operand.hbm [shape: f32[128,128], index: 4, kind: input, shape index: {}]
  %s5 = inlined_call_operand.vmem [shape: f32[8,128], index: 5, kind: output, shape index: {}]
  %s6 = sld [smem:[#allocation0]]
  $region34: #{traj_gen_so_forward.1} parent=0
    _
  %s8 = ssub.s32 1, %s6
  %s9 = scalar_select 0, %s8, %s6
  $region1: #{traj_gen_so_forward.1} parent=0
    #allocation2 [shape = 'u8[65536]{0}', space=vmem, size = 0x10000, scoped, tag = 'input window, operand 4, single buffered']
    #allocation3 [shape = 's32[1]{0}', space=sflag, size = 0x4, scoped, tag = 'scoped memory for traj_gen_so_forward.1']
    %10 = vsyncpa [#allocation3], 0
    // Predicated region
    $region2: #{traj_gen_so_forward.1} parent=1 // pred_check
      _
    $region3: #{traj_gen_so_forward.1} parent=1 // pred_check_branch
      %12 = sbr.rel (0) target = $region5
    $region4: #{traj_gen_so_forward.1} parent=1 // pred_region
      _
    $region5: #{traj_gen_so_forward.1} parent=1 // pred_fallthru
      _
    // Predicated region
    $region6: #{traj_gen_so_forward.1} parent=1 // pred_check
      _
    $region7: #{traj_gen_so_forward.1} parent=1 // pred_check_branch
      %14 = sbr.rel (0) target = $region9
    $region8: #{traj_gen_so_forward.1} parent=1 // pred_region
      _
    $region9: #{traj_gen_so_forward.1} parent=1 // pred_fallthru
      _
    // Predicated region
    $region10: #{traj_gen_so_forward.1} parent=1 // pred_check
      _
    $region11: #{traj_gen_so_forward.1} parent=1 // pred_check_branch
      %16 = sbr.rel (0) target = $region13
    $region12: #{traj_gen_so_forward.1} parent=1 // pred_region
      _
    $region13: #{traj_gen_so_forward.1} parent=1 // pred_fallthru
      _
    // Predicated region
    $region14: #{traj_gen_so_forward.1} parent=1 // pred_check
      _
    $region15: #{traj_gen_so_forward.1} parent=1 // pred_check_branch
      %18 = sbr.rel (0) target = $region17
    $region16: #{traj_gen_so_forward.1} parent=1 // pred_region
      _
    $region17: #{traj_gen_so_forward.1} parent=1 // pred_fallthru
      _
    // Predicated region
    $region18: #{traj_gen_so_forward.1} parent=1 // pred_check
      _
    $region19: #{traj_gen_so_forward.1} parent=1 // pred_check_branch
      %20 = sbr.rel (0) target = $region21
    $region20: #{traj_gen_so_forward.1} parent=1 // pred_region
      %22 = vsyncadd [#allocation3], 0
      %s23 = sshll.u32 %s4, 4
      %s24 = int_to_ptr.hbm [resolvable:$true] %s23
      %s25 = sshll.u32 [#allocation2], 4
      %s26 = int_to_ptr.vmem [resolvable:$true] %s25
      %31 = dma.hbm_to_vmem [thread:$0]  %s24, 2048, %s26, [#allocation3], 128, 128, 8
    $region21: #{traj_gen_so_forward.1} parent=1 // pred_fallthru
      _
    // Predicated region
    $region22: #{traj_gen_so_forward.1} parent=1 // pred_check
      _
    $region23: #{traj_gen_so_forward.1} parent=1 // pred_check_branch
      %33 = sbr.rel (0) target = $region25
    $region24: #{traj_gen_so_forward.1} parent=1 // pred_region
      %35 = dma.done [#allocation3], 2048
    $region25: #{traj_gen_so_forward.1} parent=1 // pred_fallthru
      _
    %v36 = vld [vmem:[%s1] sm:$0xff]
    %v37 = vld [vmem:[%s1 + $0x8] sm:$0x1]
    %v38 = vld [vmem:[%s0] sm:$0xff]
    %v39 = vld [vmem:[%s0 + $0x8] sm:$0xff]
    %v40 = vld [vmem:[%s0 + $0x10] sm:$0xff]
    %v41 = vld [vmem:[%s0 + $0x18] sm:$0xff]
    %v42 = vld [vmem:[%s0 + $0x20] sm:$0xff]
    %v43 = vld [vmem:[%s0 + $0x28] sm:$0xff]
    %v44 = vld [vmem:[%s0 + $0x30] sm:$0xff]
    %v45 = vld [vmem:[%s0 + $0x38] sm:$0xff]
    %47 = vset.pattern.permute.xlu0 0
    %48 = vperm.xlu0 %47, %v38
    %v49 = vpop.permute.xlu0 %48
    %52 = vset.pattern.permute.xlu0 0
    %53 = vperm.xlu0 %52, %v39
    %v54 = vpop.permute.xlu0 %53
    %57 = vset.pattern.permute.xlu0 0
    %58 = vperm.xlu0 %57, %v40
    %v59 = vpop.permute.xlu0 %58
    %62 = vset.pattern.permute.xlu0 0
    %63 = vperm.xlu0 %62, %v41
    %v64 = vpop.permute.xlu0 %63
    %67 = vset.pattern.permute.xlu0 0
    %68 = vperm.xlu0 %67, %v42
    %v69 = vpop.permute.xlu0 %68
    %72 = vset.pattern.permute.xlu0 0
    %73 = vperm.xlu0 %72, %v43
    %v74 = vpop.permute.xlu0 %73
    %77 = vset.pattern.permute.xlu0 0
    %78 = vperm.xlu0 %77, %v44
    %v79 = vpop.permute.xlu0 %78
    %82 = vset.pattern.permute.xlu0 0
    %83 = vperm.xlu0 %82, %v45
    %v84 = vpop.permute.xlu0 %83
    %v86 = vperm.slane %v36, 0
    %v87 = vmul.f32 %v49, %v86
    %v88 = vmul.f32 %v54, %v86
    %v89 = vmul.f32 %v59, %v86
    %v90 = vmul.f32 %v64, %v86
    %v91 = vmul.f32 %v69, %v86
    %v92 = vmul.f32 %v74, %v86
    %v93 = vmul.f32 %v79, %v86
    %v94 = vmul.f32 %v84, %v86
    %95 = vset.pattern.permute.xlu0 1
    %96 = vperm.xlu0 %95, %v38
    %v97 = vpop.permute.xlu0 %96
    %99 = vset.pattern.permute.xlu0 1
    %100 = vperm.xlu0 %99, %v39
    %v101 = vpop.permute.xlu0 %100
    %103 = vset.pattern.permute.xlu0 1
    %104 = vperm.xlu0 %103, %v40
    %v105 = vpop.permute.xlu0 %104
    %107 = vset.pattern.permute.xlu0 1
    %108 = vperm.xlu0 %107, %v41
    %v109 = vpop.permute.xlu0 %108
    %111 = vset.pattern.permute.xlu0 1
    %112 = vperm.xlu0 %111, %v42
    %v113 = vpop.permute.xlu0 %112
    %115 = vset.pattern.permute.xlu0 1
    %116 = vperm.xlu0 %115, %v43
    %v117 = vpop.permute.xlu0 %116
    %119 = vset.pattern.permute.xlu0 1
    %120 = vperm.xlu0 %119, %v44
    %v121 = vpop.permute.xlu0 %120
    %123 = vset.pattern.permute.xlu0 1
    %124 = vperm.xlu0 %123, %v45
    %v125 = vpop.permute.xlu0 %124
    %v127 = vperm.slane %v36, 1
    %v128 = vmul.f32 %v97, %v127
    %v129 = vmul.f32 %v101, %v127
    %v130 = vmul.f32 %v105, %v127
    %v131 = vmul.f32 %v109, %v127
    %v132 = vmul.f32 %v113, %v127
    %v133 = vmul.f32 %v117, %v127
    %v134 = vmul.f32 %v121, %v127
    %v135 = vmul.f32 %v125, %v127
    %v136 = vadd.f32 %v87, %v128
    %v137 = vadd.f32 %v88, %v129
    %v138 = vadd.f32 %v89, %v130
    %v139 = vadd.f32 %v90, %v131
    %v140 = vadd.f32 %v91, %v132
    %v141 = vadd.f32 %v92, %v133
    %v142 = vadd.f32 %v93, %v134
    %v143 = vadd.f32 %v94, %v135
    %v144 = vperm.slane %v36, 2
    %v145 = vadd.f32 %v136, %v144
    %v146 = vadd.f32 %v137, %v144
    %v147 = vadd.f32 %v138, %v144
    %v148 = vadd.f32 %v139, %v144
    %v149 = vadd.f32 %v140, %v144
    %v150 = vadd.f32 %v141, %v144
    %v151 = vadd.f32 %v142, %v144
    %v152 = vadd.f32 %v143, %v144
    %v153 = vld [vmem:[%s2] sm:$0xff]
    %v154 = vld [vmem:[%s2 + $0x8] sm:$0xff]
    %v155 = vld [vmem:[%s2 + $0x10] sm:$0xff]
    %v156 = vld [vmem:[%s2 + $0x18] sm:$0xff]
    %vm157 = vcmask 261120
    %v159 = vsel %vm157, 0.0, 0
    %161 = vmatpush.msra.mxu0 0.0
    %162 = vmatpush.msra.mxu0 0.0
    %163 = vmatpush.msra.mxu0 0.0
    %164 = vmatpush.msra.mxu0 0.0
    %165 = vmatpush.msra.mxu0 0.0
    %166 = vmatpush.msra.mxu0 0.0
    %167 = vmatpush.msra.mxu0 0.0
    %168 = vmatpush.msra.mxu0 0.0
    %169 = vmatpush.msra.mxu0 0.0
    %170 = vmatpush.msra.mxu0 0.0
    %171 = vmatpush.msra.mxu0 0.0
    %172 = vmatpush.msra.mxu0 0.0
    %173 = vmatpush.msra.mxu0 %v156
    %174 = vmatpush.msra.mxu0 %v155
    %175 = vmatpush.msra.mxu0 %v154
    %176 = vmatpush.msra.mxu0 %v153
    %177 = vmatmul.f32.gmra.mxu0 %v159
    %v178 = vpop.f32.mrf.mxu0
    %v179 = vadd.f32 0.0, %v178
    %180 = vdwg.mxu0
    %v181 = vadd.f32 %v145, %v179
    %v182 = vxor.u32 %v181, 2147483648
    %v183 = vmul.f32 %v182, 1.442695
    %v184 = vpow.pop %v183
    %v185 = vadd.f32 %v184, 1.0
    %v186 = vrcp.pop %v185
    %v187 = vmul.f32 %v185, %v186
    %v188 = vsub.f32 1.0, %v187
    %v189 = vmul.f32 %v186, %v188
    %v190 = vadd.f32 %v186, %v189
    %vm191 = vweird.f32 %v185
    %vm192 = vweird.f32 %v186
    %vm193 = vmor %vm191, %vm192
    %v194 = vsel %vm193, %v186, %v190
    %v195 = vand.u32 2147483647, %v185
    %vm196 = vcmp.eq.f32.partialorder %v195, 8.507059e+37
    %v197 = vand.u32 %v185, 2147483648
    %v198 = vor.u32 1.1754944e-38, %v197
    %v199 = vsel %vm196, %v198, %v194
    %v200 = vmul.f32 1.0, %v199
    %v201 = vtanh.pop %v181
    %v202 = vmul.f32 %v200, 0.0
    %204 = vrot.lane.b32.xlu0 %v201, 32
    %v205 = vpop.permute.xlu0 %204
    %v207 = vmul.f32 %v200, %v205
    %209 = vrot.lane.b32.xlu0 %v207, 32
    %v210 = vpop.permute.xlu0 %209
    %v212 = vadd.f32 %v202, %v210
    %v213 = vtanh.pop %v212
    %215 = vrot.lane.b32.xlu0 %v213, 32
    %v216 = vpop.permute.xlu0 %215
    %v218 = vmul.f32 %v200, %v216
    %220 = vrot.lane.b32.xlu0 %v218, 64
    %v221 = vpop.permute.xlu0 %220
    %v222 = vsel %vm157, %v221, 0
    %224 = vmatpush.msra.mxu0 0.0
    %225 = vmatpush.msra.mxu0 0.0
    %226 = vmatpush.msra.mxu0 0.0
    %227 = vmatpush.msra.mxu0 0.0
    %228 = vmatpush.msra.mxu0 0.0
    %229 = vmatpush.msra.mxu0 0.0
    %230 = vmatpush.msra.mxu0 0.0
    %231 = vmatpush.msra.mxu0 0.0
    %232 = vmatpush.msra.mxu0 0.0
    %233 = vmatpush.msra.mxu0 0.0
    %234 = vmatpush.msra.mxu0 0.0
    %235 = vmatpush.msra.mxu0 0.0
    %236 = vmatpush.msra.mxu0 %v156
    %237 = vmatpush.msra.mxu0 %v155
    %238 = vmatpush.msra.mxu0 %v154
    %239 = vmatpush.msra.mxu0 %v153
    %240 = vmatmul.f32.gmra.mxu0 %v222
    %v241 = vpop.f32.mrf.mxu0
    %v242 = vadd.f32 0.0, %v241
    %243 = vdwg.mxu0
    %v244 = vadd.f32 %v146, %v242
    %v245 = vxor.u32 %v244, 2147483648
    %v246 = vmul.f32 %v245, 1.442695
    %v247 = vpow.pop %v246
    %v248 = vadd.f32 %v247, 1.0
    %v249 = vrcp.pop %v248
    %v250 = vmul.f32 %v248, %v249
    %v251 = vsub.f32 1.0, %v250
    %v252 = vmul.f32 %v249, %v251
    %v253 = vadd.f32 %v249, %v252
    %vm254 = vweird.f32 %v248
    %vm255 = vweird.f32 %v249
    %vm256 = vmor %vm254, %vm255
    %v257 = vsel %vm256, %v249, %v253
    %v258 = vand.u32 2147483647, %v248
    %vm259 = vcmp.eq.f32.partialorder %v258, 8.507059e+37
    %v260 = vand.u32 %v248, 2147483648
    %v261 = vor.u32 1.1754944e-38, %v260
    %v262 = vsel %vm259, %v261, %v257
    %v263 = vmul.f32 1.0, %v262
    %v264 = vtanh.pop %v244
    %v265 = vmul.f32 %v263, %v212
    %267 = vrot.lane.b32.xlu0 %v264, 32
    %v268 = vpop.permute.xlu0 %267
    %v270 = vmul.f32 %v263, %v268
    %272 = vrot.lane.b32.xlu0 %v270, 32
    %v273 = vpop.permute.xlu0 %272
    %v275 = vadd.f32 %v265, %v273
    %v276 = vtanh.pop %v275
    %278 = vrot.lane.b32.xlu0 %v276, 32
    %v279 = vpop.permute.xlu0 %278
    %v281 = vmul.f32 %v263, %v279
    %283 = vrot.lane.b32.xlu0 %v281, 64
    %v284 = vpop.permute.xlu0 %283
    %v285 = vsel %vm157, %v284, 0
    %287 = vmatpush.msra.mxu0 0.0
    %288 = vmatpush.msra.mxu0 0.0
    %289 = vmatpush.msra.mxu0 0.0
    %290 = vmatpush.msra.mxu0 0.0
    %291 = vmatpush.msra.mxu0 0.0
    %292 = vmatpush.msra.mxu0 0.0
    %293 = vmatpush.msra.mxu0 0.0
    %294 = vmatpush.msra.mxu0 0.0
    %295 = vmatpush.msra.mxu0 0.0
    %296 = vmatpush.msra.mxu0 0.0
    %297 = vmatpush.msra.mxu0 0.0
    %298 = vmatpush.msra.mxu0 0.0
    %299 = vmatpush.msra.mxu0 %v156
    %300 = vmatpush.msra.mxu0 %v155
    %301 = vmatpush.msra.mxu0 %v154
    %302 = vmatpush.msra.mxu0 %v153
    %303 = vmatmul.f32.gmra.mxu0 %v285
    %v304 = vpop.f32.mrf.mxu0
    %v305 = vadd.f32 0.0, %v304
    %306 = vdwg.mxu0
    %v307 = vadd.f32 %v147, %v305
    %v308 = vxor.u32 %v307, 2147483648
    %v309 = vmul.f32 %v308, 1.442695
    %v310 = vpow.pop %v309
    %v311 = vadd.f32 %v310, 1.0
    %v312 = vrcp.pop %v311
    %v313 = vmul.f32 %v311, %v312
    %v314 = vsub.f32 1.0, %v313
    %v315 = vmul.f32 %v312, %v314
    %v316 = vadd.f32 %v312, %v315
    %vm317 = vweird.f32 %v311
    %vm318 = vweird.f32 %v312
    %vm319 = vmor %vm317, %vm318
    %v320 = vsel %vm319, %v312, %v316
    %v321 = vand.u32 2147483647, %v311
    %vm322 = vcmp.eq.f32.partialorder %v321, 8.507059e+37
    %v323 = vand.u32 %v311, 2147483648
    %v324 = vor.u32 1.1754944e-38, %v323
    %v325 = vsel %vm322, %v324, %v320
    %v326 = vmul.f32 1.0, %v325
    %v327 = vtanh.pop %v307
    %v328 = vmul.f32 %v326, %v275
    %330 = vrot.lane.b32.xlu0 %v327, 32
    %v331 = vpop.permute.xlu0 %330
    %v333 = vmul.f32 %v326, %v331
    %335 = vrot.lane.b32.xlu0 %v333, 32
    %v336 = vpop.permute.xlu0 %335
    %v338 = vadd.f32 %v328, %v336
    %v339 = vtanh.pop %v338
    %341 = vrot.lane.b32.xlu0 %v339, 32
    %v342 = vpop.permute.xlu0 %341
    %v344 = vmul.f32 %v326, %v342
    %346 = vrot.lane.b32.xlu0 %v344, 64
    %v347 = vpop.permute.xlu0 %346
    %v348 = vsel %vm157, %v347, 0
    %350 = vmatpush.msra.mxu0 0.0
    %351 = vmatpush.msra.mxu0 0.0
    %352 = vmatpush.msra.mxu0 0.0
    %353 = vmatpush.msra.mxu0 0.0
    %354 = vmatpush.msra.mxu0 0.0
    %355 = vmatpush.msra.mxu0 0.0
    %356 = vmatpush.msra.mxu0 0.0
    %357 = vmatpush.msra.mxu0 0.0
    %358 = vmatpush.msra.mxu0 0.0
    %359 = vmatpush.msra.mxu0 0.0
    %360 = vmatpush.msra.mxu0 0.0
    %361 = vmatpush.msra.mxu0 0.0
    %362 = vmatpush.msra.mxu0 %v156
    %363 = vmatpush.msra.mxu0 %v155
    %364 = vmatpush.msra.mxu0 %v154
    %365 = vmatpush.msra.mxu0 %v153
    %366 = vmatmul.f32.gmra.mxu0 %v348
    %v367 = vpop.f32.mrf.mxu0
    %v368 = vadd.f32 0.0, %v367
    %369 = vdwg.mxu0
    %v370 = vadd.f32 %v148, %v368
    %v371 = vxor.u32 %v370, 2147483648
    %v372 = vmul.f32 %v371, 1.442695
    %v373 = vpow.pop %v372
    %v374 = vadd.f32 %v373, 1.0
    %v375 = vrcp.pop %v374
    %v376 = vmul.f32 %v374, %v375
    %v377 = vsub.f32 1.0, %v376
    %v378 = vmul.f32 %v375, %v377
    %v379 = vadd.f32 %v375, %v378
    %vm380 = vweird.f32 %v374
    %vm381 = vweird.f32 %v375
    %vm382 = vmor %vm380, %vm381
    %v383 = vsel %vm382, %v375, %v379
    %v384 = vand.u32 2147483647, %v374
    %vm385 = vcmp.eq.f32.partialorder %v384, 8.507059e+37
    %v386 = vand.u32 %v374, 2147483648
    %v387 = vor.u32 1.1754944e-38, %v386
    %v388 = vsel %vm385, %v387, %v383
    %v389 = vmul.f32 1.0, %v388
    %v390 = vtanh.pop %v370
    %v391 = vmul.f32 %v389, %v338
    %393 = vrot.lane.b32.xlu0 %v390, 32
    %v394 = vpop.permute.xlu0 %393
    %v396 = vmul.f32 %v389, %v394
    %398 = vrot.lane.b32.xlu0 %v396, 32
    %v399 = vpop.permute.xlu0 %398
    %v401 = vadd.f32 %v391, %v399
    %v402 = vtanh.pop %v401
    %404 = vrot.lane.b32.xlu0 %v402, 32
    %v405 = vpop.permute.xlu0 %404
    %v407 = vmul.f32 %v389, %v405
    %409 = vrot.lane.b32.xlu0 %v407, 64
    %v410 = vpop.permute.xlu0 %409
    %v411 = vsel %vm157, %v410, 0
    %413 = vmatpush.msra.mxu0 0.0
    %414 = vmatpush.msra.mxu0 0.0
    %415 = vmatpush.msra.mxu0 0.0
    %416 = vmatpush.msra.mxu0 0.0
    %417 = vmatpush.msra.mxu0 0.0
    %418 = vmatpush.msra.mxu0 0.0
    %419 = vmatpush.msra.mxu0 0.0
    %420 = vmatpush.msra.mxu0 0.0
    %421 = vmatpush.msra.mxu0 0.0
    %422 = vmatpush.msra.mxu0 0.0
    %423 = vmatpush.msra.mxu0 0.0
    %424 = vmatpush.msra.mxu0 0.0
    %425 = vmatpush.msra.mxu0 %v156
    %426 = vmatpush.msra.mxu0 %v155
    %427 = vmatpush.msra.mxu0 %v154
    %428 = vmatpush.msra.mxu0 %v153
    %429 = vmatmul.f32.gmra.mxu0 %v411
    %v430 = vpop.f32.mrf.mxu0
    %v431 = vadd.f32 0.0, %v430
    %432 = vdwg.mxu0
    %v433 = vadd.f32 %v149, %v431
    %v434 = vxor.u32 %v433, 2147483648
    %v435 = vmul.f32 %v434, 1.442695
    %v436 = vpow.pop %v435
    %v437 = vadd.f32 %v436, 1.0
    %v438 = vrcp.pop %v437
    %v439 = vmul.f32 %v437, %v438
    %v440 = vsub.f32 1.0, %v439
    %v441 = vmul.f32 %v438, %v440
    %v442 = vadd.f32 %v438, %v441
    %vm443 = vweird.f32 %v437
    %vm444 = vweird.f32 %v438
    %vm445 = vmor %vm443, %vm444
    %v446 = vsel %vm445, %v438, %v442
    %v447 = vand.u32 2147483647, %v437
    %vm448 = vcmp.eq.f32.partialorder %v447, 8.507059e+37
    %v449 = vand.u32 %v437, 2147483648
    %v450 = vor.u32 1.1754944e-38, %v449
    %v451 = vsel %vm448, %v450, %v446
    %v452 = vmul.f32 1.0, %v451
    %v453 = vtanh.pop %v433
    %v454 = vmul.f32 %v452, %v401
    %456 = vrot.lane.b32.xlu0 %v453, 32
    %v457 = vpop.permute.xlu0 %456
    %v459 = vmul.f32 %v452, %v457
    %461 = vrot.lane.b32.xlu0 %v459, 32
    %v462 = vpop.permute.xlu0 %461
    %v464 = vadd.f32 %v454, %v462
    %v465 = vtanh.pop %v464
    %467 = vrot.lane.b32.xlu0 %v465, 32
    %v468 = vpop.permute.xlu0 %467
    %v470 = vmul.f32 %v452, %v468
    %472 = vrot.lane.b32.xlu0 %v470, 64
    %v473 = vpop.permute.xlu0 %472
    %v474 = vsel %vm157, %v473, 0
    %476 = vmatpush.msra.mxu0 0.0
    %477 = vmatpush.msra.mxu0 0.0
    %478 = vmatpush.msra.mxu0 0.0
    %479 = vmatpush.msra.mxu0 0.0
    %480 = vmatpush.msra.mxu0 0.0
    %481 = vmatpush.msra.mxu0 0.0
    %482 = vmatpush.msra.mxu0 0.0
    %483 = vmatpush.msra.mxu0 0.0
    %484 = vmatpush.msra.mxu0 0.0
    %485 = vmatpush.msra.mxu0 0.0
    %486 = vmatpush.msra.mxu0 0.0
    %487 = vmatpush.msra.mxu0 0.0
    %488 = vmatpush.msra.mxu0 %v156
    %489 = vmatpush.msra.mxu0 %v155
    %490 = vmatpush.msra.mxu0 %v154
    %491 = vmatpush.msra.mxu0 %v153
    %492 = vmatmul.f32.gmra.mxu0 %v474
    %v493 = vpop.f32.mrf.mxu0
    %v494 = vadd.f32 0.0, %v493
    %495 = vdwg.mxu0
    %v496 = vadd.f32 %v150, %v494
    %v497 = vxor.u32 %v496, 2147483648
    %v498 = vmul.f32 %v497, 1.442695
    %v499 = vpow.pop %v498
    %v500 = vadd.f32 %v499, 1.0
    %v501 = vrcp.pop %v500
    %v502 = vmul.f32 %v500, %v501
    %v503 = vsub.f32 1.0, %v502
    %v504 = vmul.f32 %v501, %v503
    %v505 = vadd.f32 %v501, %v504
    %vm506 = vweird.f32 %v500
    %vm507 = vweird.f32 %v501
    %vm508 = vmor %vm506, %vm507
    %v509 = vsel %vm508, %v501, %v505
    %v510 = vand.u32 2147483647, %v500
    %vm511 = vcmp.eq.f32.partialorder %v510, 8.507059e+37
    %v512 = vand.u32 %v500, 2147483648
    %v513 = vor.u32 1.1754944e-38, %v512
    %v514 = vsel %vm511, %v513, %v509
    %v515 = vmul.f32 1.0, %v514
    %v516 = vtanh.pop %v496
    %v517 = vmul.f32 %v515, %v464
    %519 = vrot.lane.b32.xlu0 %v516, 32
    %v520 = vpop.permute.xlu0 %519
    %v522 = vmul.f32 %v515, %v520
    %524 = vrot.lane.b32.xlu0 %v522, 32
    %v525 = vpop.permute.xlu0 %524
    %v527 = vadd.f32 %v517, %v525
    %v528 = vtanh.pop %v527
    %530 = vrot.lane.b32.xlu0 %v528, 32
    %v531 = vpop.permute.xlu0 %530
    %v533 = vmul.f32 %v515, %v531
    %535 = vrot.lane.b32.xlu0 %v533, 64
    %v536 = vpop.permute.xlu0 %535
    %v537 = vsel %vm157, %v536, 0
    %539 = vmatpush.msra.mxu0 0.0
    %540 = vmatpush.msra.mxu0 0.0
    %541 = vmatpush.msra.mxu0 0.0
    %542 = vmatpush.msra.mxu0 0.0
    %543 = vmatpush.msra.mxu0 0.0
    %544 = vmatpush.msra.mxu0 0.0
    %545 = vmatpush.msra.mxu0 0.0
    %546 = vmatpush.msra.mxu0 0.0
    %547 = vmatpush.msra.mxu0 0.0
    %548 = vmatpush.msra.mxu0 0.0
    %549 = vmatpush.msra.mxu0 0.0
    %550 = vmatpush.msra.mxu0 0.0
    %551 = vmatpush.msra.mxu0 %v156
    %552 = vmatpush.msra.mxu0 %v155
    %553 = vmatpush.msra.mxu0 %v154
    %554 = vmatpush.msra.mxu0 %v153
    %555 = vmatmul.f32.gmra.mxu0 %v537
    %v556 = vpop.f32.mrf.mxu0
    %v557 = vadd.f32 0.0, %v556
    %558 = vdwg.mxu0
    %v559 = vadd.f32 %v151, %v557
    %v560 = vxor.u32 %v559, 2147483648
    %v561 = vmul.f32 %v560, 1.442695
    %v562 = vpow.pop %v561
    %v563 = vadd.f32 %v562, 1.0
    %v564 = vrcp.pop %v563
    %v565 = vmul.f32 %v563, %v564
    %v566 = vsub.f32 1.0, %v565
    %v567 = vmul.f32 %v564, %v566
    %v568 = vadd.f32 %v564, %v567
    %vm569 = vweird.f32 %v563
    %vm570 = vweird.f32 %v564
    %vm571 = vmor %vm569, %vm570
    %v572 = vsel %vm571, %v564, %v568
    %v573 = vand.u32 2147483647, %v563
    %vm574 = vcmp.eq.f32.partialorder %v573, 8.507059e+37
    %v575 = vand.u32 %v563, 2147483648
    %v576 = vor.u32 1.1754944e-38, %v575
    %v577 = vsel %vm574, %v576, %v572
    %v578 = vmul.f32 1.0, %v577
    %v579 = vtanh.pop %v559
    %v580 = vmul.f32 %v578, %v527
    %582 = vrot.lane.b32.xlu0 %v579, 32
    %v583 = vpop.permute.xlu0 %582
    %v585 = vmul.f32 %v578, %v583
    %587 = vrot.lane.b32.xlu0 %v585, 32
    %v588 = vpop.permute.xlu0 %587
    %v590 = vadd.f32 %v580, %v588
    %v591 = vtanh.pop %v590
    %593 = vrot.lane.b32.xlu0 %v591, 32
    %v594 = vpop.permute.xlu0 %593
    %v596 = vmul.f32 %v578, %v594
    %598 = vrot.lane.b32.xlu0 %v596, 64
    %v599 = vpop.permute.xlu0 %598
    %v600 = vsel %vm157, %v599, 0
    %602 = vmatpush.msra.mxu0 0.0
    %603 = vmatpush.msra.mxu0 0.0
    %604 = vmatpush.msra.mxu0 0.0
    %605 = vmatpush.msra.mxu0 0.0
    %606 = vmatpush.msra.mxu0 0.0
    %607 = vmatpush.msra.mxu0 0.0
    %608 = vmatpush.msra.mxu0 0.0
    %609 = vmatpush.msra.mxu0 0.0
    %610 = vmatpush.msra.mxu0 0.0
    %611 = vmatpush.msra.mxu0 0.0
    %612 = vmatpush.msra.mxu0 0.0
    %613 = vmatpush.msra.mxu0 0.0
    %614 = vmatpush.msra.mxu0 %v156
    %615 = vmatpush.msra.mxu0 %v155
    %616 = vmatpush.msra.mxu0 %v154
    %617 = vmatpush.msra.mxu0 %v153
    %618 = vmatmul.f32.gmra.mxu0 %v600
    %v619 = vpop.f32.mrf.mxu0
    %v620 = vadd.f32 0.0, %v619
    %621 = vdwg.mxu0
    %v622 = vadd.f32 %v152, %v620
    %v623 = vxor.u32 %v622, 2147483648
    %v624 = vmul.f32 %v623, 1.442695
    %v625 = vpow.pop %v624
    %v626 = vadd.f32 %v625, 1.0
    %v627 = vrcp.pop %v626
    %v628 = vmul.f32 %v626, %v627
    %v629 = vsub.f32 1.0, %v628
    %v630 = vmul.f32 %v627, %v629
    %v631 = vadd.f32 %v627, %v630
    %vm632 = vweird.f32 %v626
    %vm633 = vweird.f32 %v627
    %vm634 = vmor %vm632, %vm633
    %v635 = vsel %vm634, %v627, %v631
    %v636 = vand.u32 2147483647, %v626
    %vm637 = vcmp.eq.f32.partialorder %v636, 8.507059e+37
    %v638 = vand.u32 %v626, 2147483648
    %v639 = vor.u32 1.1754944e-38, %v638
    %v640 = vsel %vm637, %v639, %v635
    %v641 = vmul.f32 1.0, %v640
    %v642 = vtanh.pop %v622
    %v643 = vmul.f32 %v641, %v590
    %645 = vrot.lane.b32.xlu0 %v642, 32
    %v646 = vpop.permute.xlu0 %645
    %v648 = vmul.f32 %v641, %v646
    %650 = vrot.lane.b32.xlu0 %v648, 32
    %v651 = vpop.permute.xlu0 %650
    %v653 = vadd.f32 %v643, %v651
    %v654 = vtanh.pop %v653
    %656 = vrot.lane.b32.xlu0 %v654, 32
    %v657 = vpop.permute.xlu0 %656
    %v659 = vmul.f32 %v641, %v657
    %v660 = vld [vmem:[%s3] sm:$0xff]
    %v661 = vld [vmem:[%s3 + $0x8] sm:$0xff]
    %v662 = vld [vmem:[%s3 + $0x10] sm:$0xff]
    %v663 = vld [vmem:[%s3 + $0x18] sm:$0xff]
    %v664 = vperm.slane %v36, 3
    %666 = vrot.lane.b32.xlu0 %v659, 64
    %v667 = vpop.permute.xlu0 %666
    %v668 = vsel %vm157, %v667, 0
    %670 = vmatpush.msra.mxu0 0.0
    %671 = vmatpush.msra.mxu0 0.0
    %672 = vmatpush.msra.mxu0 0.0
    %673 = vmatpush.msra.mxu0 0.0
    %674 = vmatpush.msra.mxu0 0.0
    %675 = vmatpush.msra.mxu0 0.0
    %676 = vmatpush.msra.mxu0 0.0
    %677 = vmatpush.msra.mxu0 0.0
    %678 = vmatpush.msra.mxu0 0.0
    %679 = vmatpush.msra.mxu0 0.0
    %680 = vmatpush.msra.mxu0 0.0
    %681 = vmatpush.msra.mxu0 0.0
    %682 = vmatpush.msra.mxu0 %v663
    %683 = vmatpush.msra.mxu0 %v662
    %684 = vmatpush.msra.mxu0 %v661
    %685 = vmatpush.msra.mxu0 %v660
    %686 = vmatmul.f32.gmra.mxu0 %v668
    %v687 = vpop.f32.mrf.mxu0
    %v688 = vadd.f32 %v664, %v687
    %689 = vdwg.mxu0
    %v690 = vrot.slane %v688, 4
    %v691 = vadd.f32 %v688, %v690
    %v692 = vrot.slane %v691, 2
    %v693 = vadd.f32 %v691, %v692
    %v694 = vrot.slane %v693, 1
    %v695 = vadd.f32 %v693, %v694
    %v696 = vrcp.pop 8.0
    %v697 = vmul.f32 8.0, %v696
    %v698 = vsub.f32 1.0, %v697
    %v699 = vmul.f32 %v696, %v698
    %v700 = vadd.f32 %v696, %v699
    %vm701 = vweird.f32 %v696
    %v702 = vsel %vm701, %v696, %v700
    %v703 = vmul.f32 %v695, %v702
    %v704 = vsub.f32 %v688, %v703
    %v705 = vmul.f32 %v704, %v704
    %v706 = vrot.slane %v705, 4
    %v707 = vadd.f32 %v705, %v706
    %v708 = vrot.slane %v707, 2
    %v709 = vadd.f32 %v707, %v708
    %v710 = vrot.slane %v709, 1
    %v711 = vadd.f32 %v709, %v710
    %v712 = vmul.f32 %v711, %v702
    %v713 = vadd.f32 %v712, 1e-05
    %v714 = vrsqrt.pop %v713
    %v715 = vmul.f32 %v714, %v713
    %v716 = vmul.f32 %v715, %v714
    %v717 = vmul.f32 0.5, %v716
    %v718 = vsub.f32 1.5, %v717
    %v719 = vmul.f32 %v714, %v718
    %vm720 = vweird.f32 %v713
    %vm721 = vweird.f32 %v714
    %vm722 = vmor %vm720, %vm721
    %v723 = vsel %vm722, %v714, %v719
    %v724 = vmul.f32 %v704, %v723
    %v725 = vperm.slane %v36, 4
    %v726 = vmul.f32 %v724, %v725
    %v727 = vperm.slane %v36, 5
    %v728 = vadd.f32 %v726, %v727
    %v729 = vmax.f32 %v728, 0.0
    %v730 = vld [vmem:[#allocation2] sm:$0xff]
    %v731 = vld [vmem:[#allocation2 + $0x8] sm:$0xff]
    %v732 = vld [vmem:[#allocation2 + $0x10] sm:$0xff]
    %v733 = vld [vmem:[#allocation2 + $0x18] sm:$0xff]
    %v734 = vld [vmem:[#allocation2 + $0x20] sm:$0xff]
    %v735 = vld [vmem:[#allocation2 + $0x28] sm:$0xff]
    %v736 = vld [vmem:[#allocation2 + $0x30] sm:$0xff]
    %v737 = vld [vmem:[#allocation2 + $0x38] sm:$0xff]
    %v738 = vld [vmem:[#allocation2 + $0x40] sm:$0xff]
    %v739 = vld [vmem:[#allocation2 + $0x48] sm:$0xff]
    %v740 = vld [vmem:[#allocation2 + $0x50] sm:$0xff]
    %v741 = vld [vmem:[#allocation2 + $0x58] sm:$0xff]
    %v742 = vld [vmem:[#allocation2 + $0x60] sm:$0xff]
    %v743 = vld [vmem:[#allocation2 + $0x68] sm:$0xff]
    %v744 = vld [vmem:[#allocation2 + $0x70] sm:$0xff]
    %v745 = vld [vmem:[#allocation2 + $0x78] sm:$0xff]
    %v746 = vperm.slane %v36, 6
    %747 = vmatpush.msra.mxu0 %v745
    %748 = vmatpush.msra.mxu0 %v744
    %749 = vmatpush.msra.mxu0 %v743
    %750 = vmatpush.msra.mxu0 %v742
    %751 = vmatpush.msra.mxu0 %v741
    %752 = vmatpush.msra.mxu0 %v740
    %753 = vmatpush.msra.mxu0 %v739
    %754 = vmatpush.msra.mxu0 %v738
    %755 = vmatpush.msra.mxu0 %v737
    %756 = vmatpush.msra.mxu0 %v736
    %757 = vmatpush.msra.mxu0 %v735
    %758 = vmatpush.msra.mxu0 %v734
    %759 = vmatpush.msra.mxu0 %v733
    %760 = vmatpush.msra.mxu0 %v732
    %761 = vmatpush.msra.mxu0 %v731
    %762 = vmatpush.msra.mxu0 %v730
    %763 = vmatmul.f32.gmra.mxu0 %v729
    %v764 = vpop.f32.mrf.mxu0
    %v765 = vadd.f32 %v746, %v764
    %766 = vdwg.mxu0
    %v767 = vrot.slane %v765, 4
    %v768 = vadd.f32 %v765, %v767
    %v769 = vrot.slane %v768, 2
    %v770 = vadd.f32 %v768, %v769
    %v771 = vrot.slane %v770, 1
    %v772 = vadd.f32 %v770, %v771
    %v773 = vmul.f32 %v772, %v702
    %v774 = vsub.f32 %v765, %v773
    %v775 = vmul.f32 %v774, %v774
    %v776 = vrot.slane %v775, 4
    %v777 = vadd.f32 %v775, %v776
    %v778 = vrot.slane %v777, 2
    %v779 = vadd.f32 %v777, %v778
    %v780 = vrot.slane %v779, 1
    %v781 = vadd.f32 %v779, %v780
    %v782 = vmul.f32 %v781, %v702
    %v783 = vadd.f32 %v782, 1e-05
    %v784 = vrsqrt.pop %v783
    %v785 = vmul.f32 %v784, %v783
    %v786 = vmul.f32 %v785, %v784
    %v787 = vmul.f32 0.5, %v786
    %v788 = vsub.f32 1.5, %v787
    %v789 = vmul.f32 %v784, %v788
    %vm790 = vweird.f32 %v783
    %vm791 = vweird.f32 %v784
    %vm792 = vmor %vm790, %vm791
    %v793 = vsel %vm792, %v784, %v789
    %v794 = vmul.f32 %v774, %v793
    %v795 = vperm.slane %v36, 7
    %v796 = vmul.f32 %v794, %v795
    %v797 = vperm.slane %v37, 0
    %v798 = vadd.f32 %v796, %v797
    %v799 = vmax.f32 %v798, 0.0
    %800 = vst [vmem:[%s5] sm:$0xff] %v799
    // Predicated region
    $region26: #{traj_gen_so_forward.1} parent=1 // pred_check
      _
    $region27: #{traj_gen_so_forward.1} parent=1 // pred_check_branch
      %802 = sbr.rel (0) target = $region29
    $region28: #{traj_gen_so_forward.1} parent=1 // pred_region
      _
    $region29: #{traj_gen_so_forward.1} parent=1 // pred_fallthru
      _
    // Predicated region
    $region30: #{traj_gen_so_forward.1} parent=1 // pred_check
      _
    $region31: #{traj_gen_so_forward.1} parent=1 // pred_check_branch
      %804 = sbr.rel (0) target = $region33
    $region32: #{traj_gen_so_forward.1} parent=1 // pred_region
      _
    $region33: #{traj_gen_so_forward.1} parent=1 // pred_fallthru
      _
    %805 = vsyncpa [#allocation3], 1

</llo_original>
